<compile_context>
chip_gen: v7x
topology: tpu7x:2x2x1
jax: 0.10.0
libtpu: 0.0.40
codegen_flags: <defaults>
</compile_context>

<pallas_src>
import jax
import jax.numpy as jnp
from jax.experimental import pallas as pl
from jax.experimental.pallas import tpu as pltpu

CROP = 8        # pixels removed from each border
SIZE = 84       # output spatial size
IN_SIZE = 100   # expected input spatial size for the crop path
MAX_CB = 64     # max images per grid step (keeps VMEM well under limits)


def _center_crop_kernel(x_ref, o_ref):
    # x_ref block: (Cb, 100, 100); o_ref block: (Cb, 84, 84).
    # Static spatial slice -> pure VMEM copy; DMA/store is the hot path.
    o_ref[...] = x_ref[:, CROP:CROP + SIZE, CROP:CROP + SIZE]


def center_crop(x):
    """Pallas implementation of CenterCrop(size=84).forward (NCHW input)."""
    assert x.ndim == 4, "input must be a 4D tensor"
    N, C, H, W = x.shape

    # Already cropped -> identity (no kernel launch).
    if H == SIZE and W == SIZE:
        return x

    # The crop path requires a full 100x100 observation.  (The PyTorch module
    # only checks W==100; we also validate H to avoid out-of-bounds reads.)
    if not (H == IN_SIZE and W == IN_SIZE):
        raise ValueError("unexpected input size")

    NC = N * C
    xf = x.reshape(NC, H, W)

    # Block Cb images per grid step; ensure >=2 grid steps when NC >= 2 so
    # both v7x TensorCores get work, and cap against the VMEM budget.
    cb = min(MAX_CB, max(1, pl.cdiv(NC, 2)))
    grid = (pl.cdiv(NC, cb),)

    out = pl.pallas_call(
        _center_crop_kernel,
        out_shape=jax.ShapeDtypeStruct((NC, SIZE, SIZE), x.dtype),
        grid_spec=pltpu.PrefetchScalarGridSpec(
            num_scalar_prefetch=0,
            grid=grid,
            in_specs=[pl.BlockSpec((cb, IN_SIZE, IN_SIZE),
                                   lambda i: (i, 0, 0))],
            out_specs=pl.BlockSpec((cb, SIZE, SIZE),
                                   lambda i: (i, 0, 0)),
        ),
        compiler_params=pltpu.CompilerParams(
            dimension_semantics=("parallel",)),
    )(xf)
    return out.reshape(N, C, SIZE, SIZE)


if __name__ == "__main__":
    key = jax.random.PRNGKey(0)
    # Small-but-consistent shapes: batch=2, channels=4, spatial=100 (crop path).
    x = jax.random.normal(key, (2, 4, 100, 100), dtype=jnp.float32)

    out = center_crop(x)
    out = jax.block_until_ready(out)

    # Reference: plain-JAX slicing semantics of x[:, :, 8:-8, 8:-8].
    ref = x[:, :, 8:-8, 8:-8]
    assert out.shape == (2, 4, 84, 84), out.shape
    assert out.dtype == x.dtype
    assert bool(jnp.array_equal(out, ref))

    # Odd N*C (partial last block) path.
    x_odd = jax.random.normal(jax.random.PRNGKey(2), (3, 1, 100, 100),
                              dtype=jnp.float32)
    out_odd = jax.block_until_ready(center_crop(x_odd))
    assert bool(jnp.array_equal(out_odd, x_odd[:, :, 8:-8, 8:-8]))

    # Already-cropped path (identity, no kernel).
    x84 = jax.random.normal(jax.random.PRNGKey(1), (2, 4, 84, 84), jnp.float32)
    out84 = jax.block_until_ready(center_crop(x84))
    assert bool(jnp.array_equal(out84, x84))

    print("KERNEL_OK")
</pallas_src>

<mosaic_0001>
module attributes {stable_mosaic.version = 11 : i64} {
  func.func @_center_crop_kernel(%arg0: i32, %arg1: memref<4x100x100xf32, #tpu.memory_space<vmem>>, %arg2: memref<4x84x84xf32, #tpu.memory_space<vmem>>) attributes {dimension_semantics = [#tpu.dimension_semantics<parallel>], iteration_bounds = array<i64: 2>, scalar_prefetch = 0 : i64, scratch_operands = 0 : i64, tpu.core_type = #tpu.core_type<tc>, window_params = [{transform_indices = @transform_0, window_bounds = array<i64: 4, 100, 100>}, {transform_indices = @transform_1, window_bounds = array<i64: 4, 84, 84>}]} {
    %c0 = arith.constant 0 : index
    %c8 = arith.constant 8 : index
    %c8_0 = arith.constant 8 : index
    %0 = vector.load %arg1[%c0, %c8, %c8_0] : memref<4x100x100xf32, #tpu.memory_space<vmem>>, vector<4x84x84xf32>
    %c0_1 = arith.constant 0 : index
    %c0_2 = arith.constant 0 : index
    %c0_3 = arith.constant 0 : index
    %1 = vector.load %arg2[%c0_1, %c0_2, %c0_3] : memref<4x84x84xf32, #tpu.memory_space<vmem>>, vector<4x84x84xf32>
    tpu.vector_store %arg2[%c0_1, %c0_2, %c0_3], %0 {strides = array<i32>} : memref<4x84x84xf32, #tpu.memory_space<vmem>>, vector<4x84x84xf32>,
    return
  }
  func.func @transform_0(%arg0: i32) -> (i32, i32, i32) {
    %c0_i32 = arith.constant 0 : i32
    %c0_i32_0 = arith.constant 0 : i32
    %c0_i32_1 = arith.constant 0 : i32
    return %arg0, %c0_i32, %c0_i32_0 : i32, i32, i32
  }
  func.func @transform_1(%arg0: i32) -> (i32, i32, i32) {
    %c0_i32 = arith.constant 0 : i32
    %c0_i32_0 = arith.constant 0 : i32
    %c0_i32_1 = arith.constant 0 : i32
    return %arg0, %c0_i32, %c0_i32_0 : i32, i32, i32
  }
}

</mosaic_0001>

<llo_original>
// kernel: tpu_custom_call.1
$region0: #{tpu_custom_call.1}
  #allocation0 [shape = 'u32[]', space=smem, size = 0x4, offset = 0x4, fixed_abs, tag = 'smem constant byte address 0x4 - core index']
  #allocation1 [shape = 'u32[144,128]{1,0:T(1,128)}', space=vmem, size = 0x12000, scoped, tag = 'internal scratch']
  %s0 = inlined_call_operand.vmem [shape: f32[8,100,100], index: 0, kind: input, shape index: {}]
  %s1 = inlined_call_operand.vmem [shape: f32[8,84,84], index: 1, kind: output, shape index: {}]
  %s2 = sld [smem:[#allocation0]]
  $region37: #{tpu_custom_call.1} parent=0
    _
  %s4 = ssub.s32 1, %s2
  %s5 = scalar_select 0, %s4, %s2
  loop: start=0, step=1, limit=4
  $region2: #{tpu_custom_call.1} parent=0 // loop_pre_header
    _
  $region3: #{tpu_custom_call.1} parent=0 // loop_header
    %s7 = sphi 0, %s11
    %p8 = scmp.ge.s32.totalorder %s7, 4
    %s17 = sphi 0, %s19
    %s20 = sphi 0, %s17
    %s21 = sphi 0, %s20
    %s37 = sphi 0, %s21
    %s43 = sphi 0, %s45
    %s46 = sphi 0, %s43
    %s47 = sphi 0, %s46
    %s63 = sphi 0, %s47
  $region4: #{tpu_custom_call.1} parent=0 // loop_header_branch
    %10 = sbr.rel (%p8) target = $region8
  $region5: #{tpu_custom_call.1} parent=0 // loop_body
    %s12 = ssub.s32 %s7, 1
    %s13 = ssub.s32 %s7, 2
    %s14 = sadd.s32 %s7, 1
    %s15 = ssub.s32 %s7, %s14
    %p16 = scmp.eq.s32.totalorder %s15, 0
    %s18 = sadd.s32 %s17, 1
    %s19 = scalar_select %p16, %s17, %s18
    %p22 = pneg %p16
    %p23 = scmp.eq.s32.totalorder %s7, 1
    %p24 = por %p22, %p23
    %p25 = scmp.ne.s32.totalorder %s17, %s20
    %p26 = scmp.eq.s32.totalorder %s7, 0
    %p27 = por %p25, %p26
    %p28 = scmp.ne.s32.totalorder %s17, %s20
    %p29 = scmp.eq.s32.totalorder %s12, 1
    %p30 = por %p28, %p29
    %p31 = scmp.ne.s32.totalorder %s20, %s21
    %p32 = scmp.eq.s32.totalorder %s12, 0
    %p33 = por %p31, %p32
    %p34 = scmp.ne.s32.totalorder %s20, %s21
    %p35 = scmp.eq.s32.totalorder %s13, 1
    %p36 = por %p34, %p35
    %p38 = scmp.ne.s32.totalorder %s21, %s37
    %p39 = scmp.eq.s32.totalorder %s13, 0
    %p40 = por %p38, %p39
    %s41 = ssub.s32 %s7, %s14
    %p42 = scmp.eq.s32.totalorder %s41, 0
    %s44 = sadd.s32 %s43, 1
    %s45 = scalar_select %p42, %s43, %s44
    %p48 = pneg %p42
    %p49 = scmp.eq.s32.totalorder %s7, 1
    %p50 = por %p48, %p49
    %p51 = scmp.ne.s32.totalorder %s43, %s46
    %p52 = scmp.eq.s32.totalorder %s7, 0
    %p53 = por %p51, %p52
    %p54 = scmp.ne.s32.totalorder %s43, %s46
    %p55 = scmp.eq.s32.totalorder %s12, 1
    %p56 = por %p54, %p55
    %p57 = scmp.ne.s32.totalorder %s46, %s47
    %p58 = scmp.eq.s32.totalorder %s12, 0
    %p59 = por %p57, %p58
    %p60 = scmp.ne.s32.totalorder %s46, %s47
    %p61 = scmp.eq.s32.totalorder %s13, 1
    %p62 = por %p60, %p61
    %p64 = scmp.ne.s32.totalorder %s47, %s63
    %p65 = scmp.eq.s32.totalorder %s13, 0
    %p66 = por %p64, %p65
    %p67 = scmp.le.s32.totalorder 1, %s7
    %p68 = scmp.lt.s32.totalorder %s7, 3
    %p69 = pnand %p67, %p68
    %p70 = pneg %p69
    // Predicated region
    $region9: #{tpu_custom_call.1} parent=5 // pred_check
      _
    $region10: #{tpu_custom_call.1} parent=5 // pred_check_branch
      %72 = sbr.rel (%p69) target = $region12
    $region11: #{tpu_custom_call.1} parent=5 // pred_region
      %s73 = ssub.s32 %s7, 1
    $region12: #{tpu_custom_call.1} parent=5 // pred_fallthru
      _
    %p74 = scmp.lt.s32.totalorder %s7, 2
    // Predicated region
    $region13: #{tpu_custom_call.1} parent=5 // pred_check
      %p75 = pneg %p74
    $region14: #{tpu_custom_call.1} parent=5 // pred_check_branch
      %77 = sbr.rel (%p75) target = $region16
    $region15: #{tpu_custom_call.1} parent=5 // pred_region
      // Predicated region
      $region17: #{tpu_custom_call.1} parent=15 // pred_check
        %p78 = pneg %p27
      $region18: #{tpu_custom_call.1} parent=15 // pred_check_branch
        %80 = sbr.rel (%p78) target = $region20
      $region19: #{tpu_custom_call.1} parent=15 // pred_region
        %s81 = smul.u32 4, %s7
        %p82 = scmp.lt.s32.totalorder %s81, 7
        %s83 = scalar_select %p82, %s81, 7
        %s84 = smul.addr %s83, 13
        %s85 = smul.addr %s84, 8
        %s86 = scalar_lea.vmem %s0, %s85
        %s87 = smul.u32 4, %s7
      $region20: #{tpu_custom_call.1} parent=15 // pred_fallthru
        _
    $region16: #{tpu_custom_call.1} parent=5 // pred_fallthru
      _
    %p88 = scmp.le.s32.totalorder 1, %s7
    %p89 = scmp.lt.s32.totalorder %s7, 3
    %p90 = pnand %p88, %p89
    %p91 = pneg %p90
    // Predicated region
    $region21: #{tpu_custom_call.1} parent=5 // pred_check
      _
    $region22: #{tpu_custom_call.1} parent=5 // pred_check_branch
      %93 = sbr.rel (%p90) target = $region24
    $region23: #{tpu_custom_call.1} parent=5 // pred_region
      %s94 = ssub.s32 %s7, 1
      %s95 = smul.u32 4, %s12
      %p96 = scmp.lt.s32.totalorder %s95, 7
      %s97 = scalar_select %p96, %s95, 7
      %s98 = smul.addr %s97, 13
      %s99 = smul.addr %s98, 8
      %s100 = scalar_lea.vmem %s0, %s99
      %p101 = pneg %p33
      %p102 = pneg %p30
      %p103 = pneg %p59
      %p104 = pneg %p56
      %s105 = smul.u32 4, %s12
      %p106 = scmp.lt.s32.totalorder %s105, 7
      %s107 = scalar_select %p106, %s105, 7
      %s108 = smul.addr %s107, 11
      %s109 = smul.addr %s108, 8
      %s110 = scalar_lea.vmem %s1, %s109
      %s111 = smul.u32 4, %s12
      %p112 = scmp.lt.s32.totalorder %s111, 7
      %s113 = scalar_select %p112, %s111, 7
      %s114 = smul.addr %s113, 13
      %s115 = smul.addr %s114, 8
      %s116 = scalar_lea.vmem %s0, %s115
      %s117 = smul.u32 4, %s12
      %s118 = smul.u32 4, %s12
      %p119 = scmp.lt.s32.totalorder %s118, 7
      %s120 = scalar_select %p119, %s118, 7
      %s121 = smul.addr %s120, 11
      %s122 = smul.addr %s121, 8
      %s123 = scalar_lea.vmem %s1, %s122
      %s124 = smul.u32 4, %s12
      %v125 = vld [vmem:[%s116 + $0x8] sm:$0xff]
      %v126 = vld [vmem:[%s116 + $0x10] sm:$0xff]
      %v127 = vld [vmem:[%s116 + $0x18] sm:$0xff]
      %v128 = vld [vmem:[%s116 + $0x20] sm:$0xff]
      %v129 = vld [vmem:[%s116 + $0x28] sm:$0xff]
      %v130 = vld [vmem:[%s116 + $0x30] sm:$0xff]
      %v131 = vld [vmem:[%s116 + $0x38] sm:$0xff]
      %v132 = vld [vmem:[%s116 + $0x40] sm:$0xff]
      %v133 = vld [vmem:[%s116 + $0x48] sm:$0xff]
      %v134 = vld [vmem:[%s116 + $0x50] sm:$0xff]
      %v135 = vld [vmem:[%s116 + $0x58] sm:$0xf]
      %v136 = vld [vmem:[%s116 + $0x70] sm:$0xff]
      %v137 = vld [vmem:[%s116 + $0x78] sm:$0xff]
      %v138 = vld [vmem:[%s116 + $0x80] sm:$0xff]
      %v139 = vld [vmem:[%s116 + $0x88] sm:$0xff]
      %v140 = vld [vmem:[%s116 + $0x90] sm:$0xff]
      %v141 = vld [vmem:[%s116 + $0x98] sm:$0xff]
      %v142 = vld [vmem:[%s116 + $0xa0] sm:$0xff]
      %v143 = vld [vmem:[%s116 + $0xa8] sm:$0xff]
      %v144 = vld [vmem:[%s116 + $0xb0] sm:$0xff]
      %v145 = vld [vmem:[%s116 + $0xb8] sm:$0xff]
      %v146 = vld [vmem:[%s116 + $0xc0] sm:$0xf]
      %v147 = vld [vmem:[%s116 + $0xd8] sm:$0xff]
      %v148 = vld [vmem:[%s116 + $0xe0] sm:$0xff]
      %v149 = vld [vmem:[%s116 + $0xe8] sm:$0xff]
      %v150 = vld [vmem:[%s116 + $0xf0] sm:$0xff]
      %v151 = vld [vmem:[%s116 + $0xf8] sm:$0xff]
      %v152 = vld [vmem:[%s116 + $0x100] sm:$0xff]
      %v153 = vld [vmem:[%s116 + $0x108] sm:$0xff]
      %v154 = vld [vmem:[%s116 + $0x110] sm:$0xff]
      %v155 = vld [vmem:[%s116 + $0x118] sm:$0xff]
      %v156 = vld [vmem:[%s116 + $0x120] sm:$0xff]
      %v157 = vld [vmem:[%s116 + $0x128] sm:$0xf]
      %v158 = vld [vmem:[%s116 + $0x140] sm:$0xff]
      %v159 = vld [vmem:[%s116 + $0x148] sm:$0xff]
      %v160 = vld [vmem:[%s116 + $0x150] sm:$0xff]
      %v161 = vld [vmem:[%s116 + $0x158] sm:$0xff]
      %v162 = vld [vmem:[%s116 + $0x160] sm:$0xff]
      %v163 = vld [vmem:[%s116 + $0x168] sm:$0xff]
      %v164 = vld [vmem:[%s116 + $0x170] sm:$0xff]
      %v165 = vld [vmem:[%s116 + $0x178] sm:$0xff]
      %v166 = vld [vmem:[%s116 + $0x180] sm:$0xff]
      %v167 = vld [vmem:[%s116 + $0x188] sm:$0xff]
      %v168 = vld [vmem:[%s116 + $0x190] sm:$0xf]
      %213 = vrot.lane.b32.xlu0 %v125, 120
      %v214 = vpop.permute.xlu0 %213
      %215 = vrot.lane.b32.xlu0 %v126, 120
      %v216 = vpop.permute.xlu0 %215
      %217 = vrot.lane.b32.xlu0 %v127, 120
      %v218 = vpop.permute.xlu0 %217
      %219 = vrot.lane.b32.xlu0 %v128, 120
      %v220 = vpop.permute.xlu0 %219
      %221 = vrot.lane.b32.xlu0 %v129, 120
      %v222 = vpop.permute.xlu0 %221
      %223 = vrot.lane.b32.xlu0 %v130, 120
      %v224 = vpop.permute.xlu0 %223
      %225 = vrot.lane.b32.xlu0 %v131, 120
      %v226 = vpop.permute.xlu0 %225
      %227 = vrot.lane.b32.xlu0 %v132, 120
      %v228 = vpop.permute.xlu0 %227
      %229 = vrot.lane.b32.xlu0 %v133, 120
      %v230 = vpop.permute.xlu0 %229
      %231 = vrot.lane.b32.xlu0 %v134, 120
      %v232 = vpop.permute.xlu0 %231
      %233 = vrot.lane.b32.xlu0 %v135, 120
      %v234 = vpop.permute.xlu0 %233
      %235 = vrot.lane.b32.xlu0 %v136, 120
      %v236 = vpop.permute.xlu0 %235
      %237 = vrot.lane.b32.xlu0 %v137, 120
      %v238 = vpop.permute.xlu0 %237
      %239 = vrot.lane.b32.xlu0 %v138, 120
      %v240 = vpop.permute.xlu0 %239
      %241 = vrot.lane.b32.xlu0 %v139, 120
      %v242 = vpop.permute.xlu0 %241
      %243 = vrot.lane.b32.xlu0 %v140, 120
      %v244 = vpop.permute.xlu0 %243
      %245 = vrot.lane.b32.xlu0 %v141, 120
      %v246 = vpop.permute.xlu0 %245
      %247 = vrot.lane.b32.xlu0 %v142, 120
      %v248 = vpop.permute.xlu0 %247
      %249 = vrot.lane.b32.xlu0 %v143, 120
      %v250 = vpop.permute.xlu0 %249
      %251 = vrot.lane.b32.xlu0 %v144, 120
      %v252 = vpop.permute.xlu0 %251
      %253 = vrot.lane.b32.xlu0 %v145, 120
      %v254 = vpop.permute.xlu0 %253
      %255 = vrot.lane.b32.xlu0 %v146, 120
      %v256 = vpop.permute.xlu0 %255
      %257 = vrot.lane.b32.xlu0 %v147, 120
      %v258 = vpop.permute.xlu0 %257
      %259 = vrot.lane.b32.xlu0 %v148, 120
      %v260 = vpop.permute.xlu0 %259
      %261 = vrot.lane.b32.xlu0 %v149, 120
      %v262 = vpop.permute.xlu0 %261
      %263 = vrot.lane.b32.xlu0 %v150, 120
      %v264 = vpop.permute.xlu0 %263
      %265 = vrot.lane.b32.xlu0 %v151, 120
      %v266 = vpop.permute.xlu0 %265
      %267 = vrot.lane.b32.xlu0 %v152, 120
      %v268 = vpop.permute.xlu0 %267
      %269 = vrot.lane.b32.xlu0 %v153, 120
      %v270 = vpop.permute.xlu0 %269
      %271 = vrot.lane.b32.xlu0 %v154, 120
      %v272 = vpop.permute.xlu0 %271
      %273 = vrot.lane.b32.xlu0 %v155, 120
      %v274 = vpop.permute.xlu0 %273
      %275 = vrot.lane.b32.xlu0 %v156, 120
      %v276 = vpop.permute.xlu0 %275
      %277 = vrot.lane.b32.xlu0 %v157, 120
      %v278 = vpop.permute.xlu0 %277
      %279 = vrot.lane.b32.xlu0 %v158, 120
      %v280 = vpop.permute.xlu0 %279
      %281 = vrot.lane.b32.xlu0 %v159, 120
      %v282 = vpop.permute.xlu0 %281
      %283 = vrot.lane.b32.xlu0 %v160, 120
      %v284 = vpop.permute.xlu0 %283
      %285 = vrot.lane.b32.xlu0 %v161, 120
      %v286 = vpop.permute.xlu0 %285
      %287 = vrot.lane.b32.xlu0 %v162, 120
      %v288 = vpop.permute.xlu0 %287
      %289 = vrot.lane.b32.xlu0 %v163, 120
      %v290 = vpop.permute.xlu0 %289
      %291 = vrot.lane.b32.xlu0 %v164, 120
      %v292 = vpop.permute.xlu0 %291
      %293 = vrot.lane.b32.xlu0 %v165, 120
      %v294 = vpop.permute.xlu0 %293
      %295 = vrot.lane.b32.xlu0 %v166, 120
      %v296 = vpop.permute.xlu0 %295
      %297 = vrot.lane.b32.xlu0 %v167, 120
      %v298 = vpop.permute.xlu0 %297
      %299 = vrot.lane.b32.xlu0 %v168, 120
      %v300 = vpop.permute.xlu0 %299
      %vm345 = vcmask 687104
      %346 = vst.msk [vmem:[%s123] sm:$0xff] %vm345, %v214
      %347 = vst.msk [vmem:[%s123 + $0x8] sm:$0xff] %vm345, %v216
      %348 = vst.msk [vmem:[%s123 + $0x10] sm:$0xff] %vm345, %v218
      %349 = vst.msk [vmem:[%s123 + $0x18] sm:$0xff] %vm345, %v220
      %350 = vst.msk [vmem:[%s123 + $0x20] sm:$0xff] %vm345, %v222
      %351 = vst.msk [vmem:[%s123 + $0x28] sm:$0xff] %vm345, %v224
      %352 = vst.msk [vmem:[%s123 + $0x30] sm:$0xff] %vm345, %v226
      %353 = vst.msk [vmem:[%s123 + $0x38] sm:$0xff] %vm345, %v228
      %354 = vst.msk [vmem:[%s123 + $0x40] sm:$0xff] %vm345, %v230
      %355 = vst.msk [vmem:[%s123 + $0x48] sm:$0xff] %vm345, %v232
      %vm356 = vcmask 683008
      %357 = vst.msk [vmem:[%s123 + $0x50] sm:$0xf] %vm356, %v234
      %358 = vst.msk [vmem:[%s123 + $0x58] sm:$0xff] %vm345, %v236
      %359 = vst.msk [vmem:[%s123 + $0x60] sm:$0xff] %vm345, %v238
      %360 = vst.msk [vmem:[%s123 + $0x68] sm:$0xff] %vm345, %v240
      %361 = vst.msk [vmem:[%s123 + $0x70] sm:$0xff] %vm345, %v242
      %362 = vst.msk [vmem:[%s123 + $0x78] sm:$0xff] %vm345, %v244
      %363 = vst.msk [vmem:[%s123 + $0x80] sm:$0xff] %vm345, %v246
      %364 = vst.msk [vmem:[%s123 + $0x88] sm:$0xff] %vm345, %v248
      %365 = vst.msk [vmem:[%s123 + $0x90] sm:$0xff] %vm345, %v250
      %366 = vst.msk [vmem:[%s123 + $0x98] sm:$0xff] %vm345, %v252
      %367 = vst.msk [vmem:[%s123 + $0xa0] sm:$0xff] %vm345, %v254
      %368 = vst.msk [vmem:[%s123 + $0xa8] sm:$0xf] %vm356, %v256
      %369 = vst.msk [vmem:[%s123 + $0xb0] sm:$0xff] %vm345, %v258
      %370 = vst.msk [vmem:[%s123 + $0xb8] sm:$0xff] %vm345, %v260
      %371 = vst.msk [vmem:[%s123 + $0xc0] sm:$0xff] %vm345, %v262
      %372 = vst.msk [vmem:[%s123 + $0xc8] sm:$0xff] %vm345, %v264
      %373 = vst.msk [vmem:[%s123 + $0xd0] sm:$0xff] %vm345, %v266
      %374 = vst.msk [vmem:[%s123 + $0xd8] sm:$0xff] %vm345, %v268
      %375 = vst.msk [vmem:[%s123 + $0xe0] sm:$0xff] %vm345, %v270
      %376 = vst.msk [vmem:[%s123 + $0xe8] sm:$0xff] %vm345, %v272
      %377 = vst.msk [vmem:[%s123 + $0xf0] sm:$0xff] %vm345, %v274
      %378 = vst.msk [vmem:[%s123 + $0xf8] sm:$0xff] %vm345, %v276
      %379 = vst.msk [vmem:[%s123 + $0x100] sm:$0xf] %vm356, %v278
      %380 = vst.msk [vmem:[%s123 + $0x108] sm:$0xff] %vm345, %v280
      %381 = vst.msk [vmem:[%s123 + $0x110] sm:$0xff] %vm345, %v282
      %382 = vst.msk [vmem:[%s123 + $0x118] sm:$0xff] %vm345, %v284
      %383 = vst.msk [vmem:[%s123 + $0x120] sm:$0xff] %vm345, %v286
      %384 = vst.msk [vmem:[%s123 + $0x128] sm:$0xff] %vm345, %v288
      %385 = vst.msk [vmem:[%s123 + $0x130] sm:$0xff] %vm345, %v290
      %386 = vst.msk [vmem:[%s123 + $0x138] sm:$0xff] %vm345, %v292
      %387 = vst.msk [vmem:[%s123 + $0x140] sm:$0xff] %vm345, %v294
      %388 = vst.msk [vmem:[%s123 + $0x148] sm:$0xff] %vm345, %v296
      %389 = vst.msk [vmem:[%s123 + $0x150] sm:$0xff] %vm345, %v298
      %390 = vst.msk [vmem:[%s123 + $0x158] sm:$0xf] %vm356, %v300
      %s391 = smul.u32 4, %s12
      %p392 = scmp.lt.s32.totalorder %s391, 7
      %s393 = scalar_select %p392, %s391, 7
      %s394 = smul.addr %s393, 11
      %s395 = smul.addr %s394, 8
      %s396 = scalar_lea.vmem %s1, %s395
      // Predicated region
      $region25: #{tpu_custom_call.1} parent=23 // pred_check
        %p397 = pneg %p56
      $region26: #{tpu_custom_call.1} parent=23 // pred_check_branch
        %399 = sbr.rel (%p397) target = $region28
      $region27: #{tpu_custom_call.1} parent=23 // pred_region
        %s400 = smul.u32 4, %s12
      $region28: #{tpu_custom_call.1} parent=23 // pred_fallthru
        _
    $region24: #{tpu_custom_call.1} parent=5 // pred_fallthru
      _
    %p401 = scmp.le.s32.totalorder 2, %s7
    // Predicated region
    $region29: #{tpu_custom_call.1} parent=5 // pred_check
      %p402 = pneg %p401
    $region30: #{tpu_custom_call.1} parent=5 // pred_check_branch
      %404 = sbr.rel (%p402) target = $region32
    $region31: #{tpu_custom_call.1} parent=5 // pred_region
      %s405 = ssub.s32 %s7, 2
      // Predicated region
      $region33: #{tpu_custom_call.1} parent=31 // pred_check
        %p406 = pneg %p62
      $region34: #{tpu_custom_call.1} parent=31 // pred_check_branch
        %408 = sbr.rel (%p406) target = $region36
      $region35: #{tpu_custom_call.1} parent=31 // pred_region
        %s409 = smul.u32 4, %s13
        %p410 = scmp.lt.s32.totalorder %s409, 7
        %s411 = scalar_select %p410, %s409, 7
        %s412 = smul.addr %s411, 11
        %s413 = smul.addr %s412, 8
        %s414 = scalar_lea.vmem %s1, %s413
      $region36: #{tpu_custom_call.1} parent=31 // pred_fallthru
        _
    $region32: #{tpu_custom_call.1} parent=5 // pred_fallthru
      _
  $region6: #{tpu_custom_call.1} parent=0 // loop_footer
    %s11 = sadd.s32 1, %s7
  $region7: #{tpu_custom_call.1} parent=0 // loop_footer_branch
    %6 = sbr.rel target = $region3
  $region8: #{tpu_custom_call.1} parent=0 // loop_exit
    _

</llo_original>
